<compile_context>
chip_gen: v7x
topology: tpu7x:2x2x1
jax: 0.10.0
libtpu: 0.0.40
codegen_flags: <defaults>
</compile_context>

<pallas_src>
import math

import jax
import jax.numpy as jnp
from jax.experimental import pallas as pl
from jax.experimental.pallas import tpu as pltpu

_LANES = 128
_MIN_ROWS = 8                     # below this, fully fuse instead of tiny blocks
_MAX_TILE_ROWS = 4096             # (4096, 128) f32 block = 2 MiB per stream
_VMEM_LIMIT = 40 * 1024 * 1024    # > v5e 16 MiB scoped default, < v7x 64 MiB phys

_BOOL_OK = None                   # cached: does Mosaic accept bool memrefs?
_NUM_TC = None                    # cached: TensorCores per device


def _where_kernel(c_ref, x_ref, y_ref, o_ref):
    """Elementwise select; truthiness test and output cast happen in-kernel."""
    c = c_ref[...]
    mask = c if c.dtype == jnp.bool_ else (c != 0)
    o_ref[...] = jnp.where(mask, x_ref[...], y_ref[...]).astype(o_ref.dtype)


def _round_up(v, m):
    return ((v + m - 1) // m) * m


def _bool_inputs_supported():
    """Probe once whether bool inputs lower cleanly; else fall back to int8."""
    global _BOOL_OK
    if _BOOL_OK is None:
        try:
            c = jnp.zeros((8, _LANES), jnp.bool_)
            x = jnp.ones((8, _LANES), jnp.float32)
            out = pl.pallas_call(
                _where_kernel,
                out_shape=jax.ShapeDtypeStruct((8, _LANES), jnp.float32),
            )(c, x, x)
            jax.block_until_ready(out)
            _BOOL_OK = True
        except Exception:
            _BOOL_OK = False
    return _BOOL_OK


def _num_tensorcores():
    """Best-effort TensorCores-per-device (v5e/v6e: 1, v4/v5p/v7x: 2)."""
    global _NUM_TC
    if _NUM_TC is not None:
        return _NUM_TC
    n = 1
    try:
        info = pltpu.get_tpu_info()
        for name in ("num_cores", "cores_per_chip", "num_tensorcores", "core_count"):
            v = getattr(info, name, None)
            if isinstance(v, int) and v >= 1:
                n = v
                break
    except Exception:
        pass
    if n == 1:
        try:
            kind = jax.devices()[0].device_kind.lower()
            if any(tag in kind for tag in ("v4", "v5p", "v7")):
                n = 2
        except Exception:
            pass
    _NUM_TC = n
    return n


def _where_tiled(ops, out_shape, out_dtype, k):
    """Fast path: trailing dims fused into a lane-dense (rows, 128) slab;
    broadcasting on the leading `k` head dims is expressed via index_maps."""
    cond, xv, yv = ops
    head = tuple(out_shape[:k])
    rows = math.prod(out_shape[k:]) // _LANES

    def _slab(o):
        return o.reshape(o.shape[:k] + (rows, _LANES))   # contiguous reshape

    cond2, x2, y2 = _slab(cond), _slab(xv), _slab(yv)

    # --- row tiling (generation aware) -------------------------------------
    num_tc = _num_tensorcores()
    head_steps = math.prod(head) if head else 1
    n_row_blocks = pl.cdiv(rows, _MAX_TILE_ROWS)
    if num_tc > 1 and rows >= 128:
        # Balance the total step count across TensorCores (megacore / v7x).
        while (head_steps * n_row_blocks) % num_tc != 0:
            n_row_blocks += 1
    if n_row_blocks == 1:
        row_tile = rows                                   # full dim: always legal
    else:
        row_tile = min(rows, _round_up(pl.cdiv(rows, n_row_blocks), 32))
    n_row_blocks = pl.cdiv(rows, row_tile)

    # --- grid ordering: broadcast head axes innermost -----------------------
    bcast_count = [sum(1 for o in ops if o.shape[d] == 1) for d in range(k)]
    non_bcast = [d for d in range(k) if bcast_count[d] == 0]
    bcast = sorted((d for d in range(k) if bcast_count[d] > 0),
                   key=lambda d: (bcast_count[d], head[d]))
    grid_dims = tuple(non_bcast) + ("row",) + tuple(bcast)
    grid = tuple(n_row_blocks if d == "row" else head[d] for d in grid_dims)
    pos = {d: i for i, d in enumerate(grid_dims)}
    row_pos = pos["row"]

    def _in_spec(op):
        op_head = op.shape[:k]
        block = (1,) * k + (row_tile, _LANES)

        def index_map(*idx, _oh=op_head):
            hd = tuple(0 if _oh[d] == 1 else idx[pos[d]] for d in range(k))
            return hd + (idx[row_pos], 0)

        return pl.BlockSpec(block, index_map)

    def out_index_map(*idx):
        return tuple(idx[pos[d]] for d in range(k)) + (idx[row_pos], 0)

    out_spec = pl.BlockSpec((1,) * k + (row_tile, _LANES), out_index_map)

    out2 = pl.pallas_call(
        _where_kernel,
        out_shape=jax.ShapeDtypeStruct(head + (rows, _LANES), out_dtype),
        grid_spec=pltpu.PrefetchScalarGridSpec(
            num_scalar_prefetch=0,
            grid=grid,
            in_specs=[_in_spec(cond2), _in_spec(x2), _in_spec(y2)],
            out_specs=out_spec,
        ),
        compiler_params=pltpu.CompilerParams(
            dimension_semantics=("parallel",) * len(grid),
            vmem_limit_bytes=_VMEM_LIMIT,
        ),
    )(cond2, x2, y2)

    return out2.reshape(out_shape)


def _where_padded(ops, out_shape, out_dtype):
    """Rare path: total element count is not a multiple of 128.  Operands are
    already materialized to out_shape; pad to (8,128) granularity and tile."""
    # TODO(synk): a masked-store epilogue block would avoid the pad/slice passes.
    n = math.prod(out_shape)
    blk = 8 * _LANES
    n_pad = pl.cdiv(n, blk) * blk

    def _prep(a):
        flat = a.reshape(-1)
        return jnp.pad(flat, (0, n_pad - n)).reshape(n_pad // _LANES, _LANES)

    c2, x2, y2 = (_prep(o) for o in ops)
    rows = n_pad // _LANES
    row_tile = min(rows, _MAX_TILE_ROWS)
    spec = pl.BlockSpec((row_tile, _LANES), lambda i: (i, 0))

    out2 = pl.pallas_call(
        _where_kernel,
        out_shape=jax.ShapeDtypeStruct((rows, _LANES), out_dtype),
        grid_spec=pltpu.PrefetchScalarGridSpec(
            num_scalar_prefetch=0,
            grid=(pl.cdiv(rows, row_tile),),
            in_specs=[spec, spec, spec],
            out_specs=spec,
        ),
        compiler_params=pltpu.CompilerParams(
            dimension_semantics=("parallel",),
            vmem_limit_bytes=_VMEM_LIMIT,
        ),
    )(c2, x2, y2)
    return out2.reshape(-1)[:n].reshape(out_shape)


def pallas_where(condition, x, y):
    """where(condition, x, y) with NumPy/PyTorch broadcasting; the select runs
    inside a Pallas TPU kernel on lane-dense (rows, 128) blocks."""
    condition = jnp.asarray(condition)
    x = jnp.asarray(x)
    y = jnp.asarray(y)

    out_shape = jnp.broadcast_shapes(condition.shape, x.shape, y.shape)
    out_dtype = jnp.result_type(x.dtype, y.dtype)
    total = math.prod(out_shape) if out_shape else 1

    if total == 0:
        return jnp.zeros(out_shape, out_dtype)
    if len(out_shape) == 0:
        return jnp.where(condition, x, y).astype(out_dtype)   # scalar case

    cond = condition
    if cond.dtype == jnp.bool_ and not _bool_inputs_supported():
        cond = cond.astype(jnp.int8)   # only if Mosaic rejects bool memrefs

    ndim = len(out_shape)

    def _align(a):  # rank-align with leading 1s (metadata only)
        return a.reshape((1,) * (ndim - a.ndim) + a.shape)

    ops = [_align(cond), _align(x), _align(y)]

    # Longest trailing run of dims on which no operand broadcasts -> fused tail.
    k = ndim
    while k > 0 and all(o.shape[k - 1] == out_shape[k - 1] for o in ops):
        k -= 1
    tail = math.prod(out_shape[k:]) if k < ndim else 1

    if tail % _LANES != 0 or tail // _LANES < _MIN_ROWS:
        # Tiny / unaligned fused tail: the broadcasting operands are the small
        # ones, so materialize them; then every dim fuses and the kernel runs
        # on a few big lane-dense blocks instead of an overhead-dominated
        # tiny-block grid.
        ops = [jnp.broadcast_to(o, out_shape) for o in ops]
        k = 0
        tail = total

    if tail % _LANES == 0:
        return _where_tiled(ops, out_shape, out_dtype, k)
    return _where_padded(ops, out_shape, out_dtype)


class ConvModel:
    """JAX mirror of the PyTorch ConvModel (no parameters)."""

    def __call__(self, condition, x, y):
        return pallas_where(condition, x, y)


if __name__ == "__main__":
    key = jax.random.PRNGKey(0)
    kc, kx, ky, k2, k3 = jax.random.split(key, 5)

    model = ConvModel()

    # Case 1: NCHW broadcast like the original test
    # condition [2,4,16,16], x [2,1,16,16], y [1,4,16,16]
    condition = jax.random.uniform(kc, (2, 4, 16, 16)) > 0.5
    x = jax.random.normal(kx, (2, 1, 16, 16), dtype=jnp.float32)
    y = jax.random.normal(ky, (1, 4, 16, 16), dtype=jnp.float32)
    out = jax.block_until_ready(model(condition, x, y))
    ref = jnp.where(condition, x, y)
    assert out.shape == ref.shape and out.dtype == ref.dtype, (out.shape, ref.shape)
    assert jnp.array_equal(out, ref), "case 1 mismatch vs jnp.where"

    # Case 2: lane-aligned tail; broadcasting expressed through the grid
    ka, kb, kd = jax.random.split(k2, 3)
    c2 = jax.random.uniform(ka, (2, 3, 8, 128)) > 0.3
    x2 = jax.random.normal(kb, (2, 1, 8, 128), dtype=jnp.float32)
    y2 = jax.random.normal(kd, (1, 3, 8, 128), dtype=jnp.float32)
    out2 = jax.block_until_ready(model(c2, x2, y2))
    assert jnp.array_equal(out2, jnp.where(c2, x2, y2)), "case 2 mismatch"

    # Case 3: non-bool condition (truthiness semantics), no broadcasting
    ke, kf, kg = jax.random.split(k3, 3)
    c3 = (jax.random.uniform(ke, (4, 8, 128)) > 0.5).astype(jnp.float32) * 0.5
    x3 = jax.random.normal(kf, (4, 8, 128), dtype=jnp.float32)
    y3 = jax.random.normal(kg, (4, 8, 128), dtype=jnp.float32)
    out3 = jax.block_until_ready(model(c3, x3, y3))
    assert jnp.array_equal(out3, jnp.where(c3 != 0, x3, y3)), "case 3 mismatch"

    print("KERNEL_OK")
</pallas_src>

<mosaic_0001>
module attributes {stable_mosaic.version = 11 : i64} {
  func.func @_where_kernel(%arg0: memref<8x128xi32, #tpu.memory_space<vmem>>, %arg1: memref<8x128xf32, #tpu.memory_space<vmem>>, %arg2: memref<8x128xf32, #tpu.memory_space<vmem>>, %arg3: memref<8x128xf32, #tpu.memory_space<vmem>>) attributes {dimension_semantics = [], scalar_prefetch = 0 : i64, scratch_operands = 0 : i64, tpu.core_type = #tpu.core_type<tc>} {
    %c0 = arith.constant 0 : index
    %c0_0 = arith.constant 0 : index
    %0 = vector.load %arg0[%c0, %c0_0] : memref<8x128xi32, #tpu.memory_space<vmem>>, vector<8x128xi32>
    %cst = arith.constant dense<0> : vector<8x128xi32>
    %1 = arith.cmpi ne, %0, %cst : vector<8x128xi32>
    %c0_1 = arith.constant 0 : index
    %c0_2 = arith.constant 0 : index
    %2 = vector.load %arg1[%c0_1, %c0_2] : memref<8x128xf32, #tpu.memory_space<vmem>>, vector<8x128xf32>
    %c0_3 = arith.constant 0 : index
    %c0_4 = arith.constant 0 : index
    %3 = vector.load %arg2[%c0_3, %c0_4] : memref<8x128xf32, #tpu.memory_space<vmem>>, vector<8x128xf32>
    %4 = arith.select %1, %2, %3 : vector<8x128xi1>, vector<8x128xf32>
    %c0_5 = arith.constant 0 : index
    %c0_6 = arith.constant 0 : index
    %5 = vector.load %arg3[%c0_5, %c0_6] : memref<8x128xf32, #tpu.memory_space<vmem>>, vector<8x128xf32>
    tpu.vector_store %arg3[%c0_5, %c0_6], %4 {strides = array<i32>} : memref<8x128xf32, #tpu.memory_space<vmem>>, vector<8x128xf32>,
    return
  }
}

module attributes {stable_mosaic.version = 11 : i64} {
  func.func @_where_kernel(%arg0: i32, %arg1: memref<16x128xi8, #tpu.memory_space<vmem>>, %arg2: memref<16x128xf32, #tpu.memory_space<vmem>>, %arg3: memref<16x128xf32, #tpu.memory_space<vmem>>, %arg4: memref<16x128xf32, #tpu.memory_space<vmem>>) attributes {dimension_semantics = [#tpu.dimension_semantics<parallel>], iteration_bounds = array<i64: 1>, scalar_prefetch = 0 : i64, scratch_operands = 0 : i64, tpu.core_type = #tpu.core_type<tc>, window_params = [{transform_indices = @transform_0, window_bounds = array<i64: 16, 128>}, {transform_indices = @transform_1, window_bounds = array<i64: 16, 128>}, {transform_indices = @transform_2, window_bounds = array<i64: 16, 128>}, {transform_indices = @transform_3, window_bounds = array<i64: 16, 128>}]} {
    %c0 = arith.constant 0 : index
    %c0_0 = arith.constant 0 : index
    %0 = vector.load %arg1[%c0, %c0_0] : memref<16x128xi8, #tpu.memory_space<vmem>>, vector<16x128xi8>
    %c0_i8 = arith.constant 0 : i8
    %1 = vector.broadcast %c0_i8 : i8 to vector<16x128xi8>
    %2 = arith.cmpi ne, %0, %1 : vector<16x128xi8>
    %c0_1 = arith.constant 0 : index
    %c0_2 = arith.constant 0 : index
    %3 = vector.load %arg2[%c0_1, %c0_2] : memref<16x128xf32, #tpu.memory_space<vmem>>, vector<16x128xf32>
    %c0_3 = arith.constant 0 : index
    %c0_4 = arith.constant 0 : index
    %4 = vector.load %arg3[%c0_3, %c0_4] : memref<16x128xf32, #tpu.memory_space<vmem>>, vector<16x128xf32>
    %5 = arith.select %2, %3, %4 : vector<16x128xi1>, vector<16x128xf32>
    %c0_5 = arith.constant 0 : index
    %c0_6 = arith.constant 0 : index
    %6 = vector.load %arg4[%c0_5, %c0_6] : memref<16x128xf32, #tpu.memory_space<vmem>>, vector<16x128xf32>
    tpu.vector_store %arg4[%c0_5, %c0_6], %5 {strides = array<i32>} : memref<16x128xf32, #tpu.memory_space<vmem>>, vector<16x128xf32>,
    return
  }
  func.func @transform_0(%arg0: i32) -> (i32, i32) {
    %c0_i32 = arith.constant 0 : i32
    %c0_i32_0 = arith.constant 0 : i32
    return %arg0, %c0_i32 : i32, i32
  }
  func.func @transform_1(%arg0: i32) -> (i32, i32) {
    %c0_i32 = arith.constant 0 : i32
    %c0_i32_0 = arith.constant 0 : i32
    return %arg0, %c0_i32 : i32, i32
  }
  func.func @transform_2(%arg0: i32) -> (i32, i32) {
    %c0_i32 = arith.constant 0 : i32
    %c0_i32_0 = arith.constant 0 : i32
    return %arg0, %c0_i32 : i32, i32
  }
  func.func @transform_3(%arg0: i32) -> (i32, i32) {
    %c0_i32 = arith.constant 0 : i32
    %c0_i32_0 = arith.constant 0 : i32
    return %arg0, %c0_i32 : i32, i32
  }
}

</mosaic_0001>

<llo_original>
// kernel: tpu_custom_call.1
$region0: #{tpu_custom_call.1}
  #allocation0 [shape = 'u32[]', space=smem, size = 0x4, offset = 0x4, fixed_abs, tag = 'smem constant byte address 0x4 - core index']
  #allocation1 [shape = 'u32[144,128]{1,0:T(1,128)}', space=vmem, size = 0x12000, scoped, tag = 'internal scratch']
  %s0 = inlined_call_operand.vmem [shape: s32[8,128], index: 0, kind: input, shape index: {}]
  %s1 = inlined_call_operand.vmem [shape: f32[8,128], index: 1, kind: input, shape index: {}]
  %s2 = inlined_call_operand.vmem [shape: f32[8,128], index: 2, kind: input, shape index: {}]
  %s3 = inlined_call_operand.hbm [shape: f32[8,128], index: 3, kind: output, shape index: {}]
  %s4 = sld [smem:[#allocation0]]
  $region22: #{tpu_custom_call.1} parent=0
    _
  %s6 = ssub.s32 1, %s4
  %s7 = scalar_select 0, %s6, %s4
  $region1: #{tpu_custom_call.1} parent=0
    #allocation2 [shape = 'u8[4096]{0}', space=vmem, size = 0x1000, scoped, tag = 'output window, operand 0, single buffered']
    #allocation3 [shape = 's32[1]{0}', space=sflag, size = 0x4, scoped, tag = 'scoped memory for tpu_custom_call.1']
    %8 = vsyncpa [#allocation3], 0
    // Predicated region
    $region2: #{tpu_custom_call.1} parent=1 // pred_check
      _
    $region3: #{tpu_custom_call.1} parent=1 // pred_check_branch
      %10 = sbr.rel (0) target = $region5
    $region4: #{tpu_custom_call.1} parent=1 // pred_region
      _
    $region5: #{tpu_custom_call.1} parent=1 // pred_fallthru
      _
    // Predicated region
    $region6: #{tpu_custom_call.1} parent=1 // pred_check
      _
    $region7: #{tpu_custom_call.1} parent=1 // pred_check_branch
      %12 = sbr.rel (0) target = $region9
    $region8: #{tpu_custom_call.1} parent=1 // pred_region
      _
    $region9: #{tpu_custom_call.1} parent=1 // pred_fallthru
      _
    // Predicated region
    $region10: #{tpu_custom_call.1} parent=1 // pred_check
      _
    $region11: #{tpu_custom_call.1} parent=1 // pred_check_branch
      %14 = sbr.rel (0) target = $region13
    $region12: #{tpu_custom_call.1} parent=1 // pred_region
      _
    $region13: #{tpu_custom_call.1} parent=1 // pred_fallthru
      _
    %v15 = vld [vmem:[%s0] sm:$0xff]
    %vm16 = vcmp.ne.s32.totalorder %v15, 0
    %v17 = vld [vmem:[%s1] sm:$0xff]
    %v18 = vld [vmem:[%s2] sm:$0xff]
    %v19 = vsel %vm16, %v17, %v18
    %20 = vst [vmem:[#allocation2] sm:$0xff] %v19
    // Predicated region
    $region14: #{tpu_custom_call.1} parent=1 // pred_check
      _
    $region15: #{tpu_custom_call.1} parent=1 // pred_check_branch
      %22 = sbr.rel (0) target = $region17
    $region16: #{tpu_custom_call.1} parent=1 // pred_region
      %s24 = ssub.s32 128, 128
      %25 = vsyncadd [#allocation3], %s24
      %s27 = sshll.u32 [#allocation2], 4
      %s28 = int_to_ptr.vmem [resolvable:$true] %s27
      %30 = dma.vmem_to_hbm [thread:$0]  %s28, 128, %s3, [#allocation3]
    $region17: #{tpu_custom_call.1} parent=1 // pred_fallthru
      _
    // Predicated region
    $region18: #{tpu_custom_call.1} parent=1 // pred_check
      _
    $region19: #{tpu_custom_call.1} parent=1 // pred_check_branch
      %32 = sbr.rel (0) target = $region21
    $region20: #{tpu_custom_call.1} parent=1 // pred_region
      %33 = dma.done [#allocation3], 128
    $region21: #{tpu_custom_call.1} parent=1 // pred_fallthru
      _
    %34 = vsyncpa [#allocation3], 1

// kernel: tpu_custom_call.1
$region0: #{tpu_custom_call.1}
  #allocation0 [shape = 'u32[]', space=smem, size = 0x4, offset = 0x4, fixed_abs, tag = 'smem constant byte address 0x4 - core index']
  #allocation1 [shape = 'u32[144,128]{1,0:T(1,128)}', space=vmem, size = 0x12000, scoped, tag = 'internal scratch']
  %s0 = inlined_call_operand.hbm [shape: s8[16,128], index: 0, kind: input, shape index: {}]
  %s1 = inlined_call_operand.hbm [shape: f32[16,128], index: 1, kind: input, shape index: {}]
  %s2 = inlined_call_operand.hbm [shape: f32[16,128], index: 2, kind: input, shape index: {}]
  %s3 = inlined_call_operand.hbm [shape: f32[16,128], index: 3, kind: output, shape index: {}]
  %s4 = sld [smem:[#allocation0]]
  $region34: #{tpu_custom_call.1} parent=0
    _
  %s6 = ssub.s32 1, %s4
  %s7 = scalar_select 0, %s6, %s4
  $region1: #{tpu_custom_call.1} parent=0
    #allocation2 [shape = 'u8[2048]{0}', space=vmem, size = 0x800, scoped, tag = 'input window, operand 0, single buffered']
    #allocation3 [shape = 's32[1]{0}', space=sflag, size = 0x4, scoped, tag = 'scoped memory for tpu_custom_call.1']
    #allocation4 [shape = 's32[1]{0}', space=sflag, size = 0x4, scoped, tag = 'scoped memory for tpu_custom_call.1']
    #allocation5 [shape = 'u8[8192]{0}', space=vmem, size = 0x2000, scoped, tag = 'input window, operand 1, single buffered']
    #allocation6 [shape = 's32[1]{0}', space=sflag, size = 0x4, scoped, tag = 'scoped memory for tpu_custom_call.1']
    #allocation7 [shape = 'u8[8192]{0}', space=vmem, size = 0x2000, scoped, tag = 'input window, operand 2, single buffered']
    #allocation8 [shape = 'u8[8192]{0}', space=vmem, size = 0x2000, scoped, tag = 'output window, operand 0, single buffered']
    %8 = vsyncpa [#allocation3], 0
    %9 = vsyncpa [#allocation6], 0
    %10 = vsyncpa [#allocation4], 0
    // Predicated region
    $region2: #{tpu_custom_call.1} parent=1 // pred_check
      _
    $region3: #{tpu_custom_call.1} parent=1 // pred_check_branch
      %12 = sbr.rel (0) target = $region5
    $region4: #{tpu_custom_call.1} parent=1 // pred_region
      %s14 = ssub.s32 64, 64
      %15 = vsyncadd [#allocation3], %s14
      %s16 = sshll.u32 [#allocation2], 4
      %s17 = int_to_ptr.vmem [resolvable:$true] %s16
      %22 = dma.hbm_to_vmem [thread:$0]  %s0, 64, %s17, [#allocation3], 32, 32, 2
    $region5: #{tpu_custom_call.1} parent=1 // pred_fallthru
      _
    // Predicated region
    $region6: #{tpu_custom_call.1} parent=1 // pred_check
      _
    $region7: #{tpu_custom_call.1} parent=1 // pred_check_branch
      %24 = sbr.rel (0) target = $region9
    $region8: #{tpu_custom_call.1} parent=1 // pred_region
      %s26 = ssub.s32 256, 256
      %27 = vsyncadd [#allocation6], %s26
      %s28 = sshll.u32 [#allocation5], 4
      %s29 = int_to_ptr.vmem [resolvable:$true] %s28
      %34 = dma.hbm_to_vmem [thread:$0]  %s1, 256, %s29, [#allocation6], 128, 128, 8
    $region9: #{tpu_custom_call.1} parent=1 // pred_fallthru
      _
    // Predicated region
    $region10: #{tpu_custom_call.1} parent=1 // pred_check
      _
    $region11: #{tpu_custom_call.1} parent=1 // pred_check_branch
      %36 = sbr.rel (0) target = $region13
    $region12: #{tpu_custom_call.1} parent=1 // pred_region
      %s38 = ssub.s32 256, 256
      %39 = vsyncadd [#allocation6], %s38
      %s40 = sshll.u32 [#allocation7], 4
      %s41 = int_to_ptr.vmem [resolvable:$true] %s40
      %46 = dma.hbm_to_vmem [thread:$0]  %s2, 256, %s41, [#allocation6], 128, 128, 8
    $region13: #{tpu_custom_call.1} parent=1 // pred_fallthru
      _
    // Predicated region
    $region14: #{tpu_custom_call.1} parent=1 // pred_check
      _
    $region15: #{tpu_custom_call.1} parent=1 // pred_check_branch
      %48 = sbr.rel (0) target = $region17
    $region16: #{tpu_custom_call.1} parent=1 // pred_region
      %49 = dma.done [#allocation3], 64
    $region17: #{tpu_custom_call.1} parent=1 // pred_fallthru
      _
    // Predicated region
    $region18: #{tpu_custom_call.1} parent=1 // pred_check
      _
    $region19: #{tpu_custom_call.1} parent=1 // pred_check_branch
      %51 = sbr.rel (0) target = $region21
    $region20: #{tpu_custom_call.1} parent=1 // pred_region
      %52 = dma.done [#allocation6], 256
    $region21: #{tpu_custom_call.1} parent=1 // pred_fallthru
      _
    // Predicated region
    $region22: #{tpu_custom_call.1} parent=1 // pred_check
      _
    $region23: #{tpu_custom_call.1} parent=1 // pred_check_branch
      %54 = sbr.rel (0) target = $region25
    $region24: #{tpu_custom_call.1} parent=1 // pred_region
      %55 = dma.done [#allocation6], 256
    $region25: #{tpu_custom_call.1} parent=1 // pred_fallthru
      _
    %v58 = vld [vmem:[#allocation2] sm:$0x3]
    %v59 = vld [vmem:[#allocation2 + $0x2] sm:$0x3]
    %vm60 = vnez %v58
    %vm61 = vnez %v59
    %v62 = vld [vmem:[#allocation5] sm:$0xff]
    %v63 = vld [vmem:[#allocation5 + $0x8] sm:$0xff]
    %v64 = vld [vmem:[#allocation7] sm:$0xff]
    %v65 = vld [vmem:[#allocation7 + $0x8] sm:$0xff]
    %v66 = vsel %vm60, 16843009, 0
    %v67 = vsel %vm61, 16843009, 0
    %v68 = vunpack.c.0.s8 %v66
    %v69 = vunpack.c.0.s8 %v67
    %vm70 = vcmp.ne.s32.totalorder %v68, 0
    %vm71 = vcmp.ne.s32.totalorder %v69, 0
    %v72 = vsel %vm70, %v62, %v64
    %v73 = vsel %vm71, %v63, %v65
    %74 = vst [vmem:[#allocation8] sm:$0xff] %v72
    %75 = vst [vmem:[#allocation8 + $0x8] sm:$0xff] %v73
    // Predicated region
    $region26: #{tpu_custom_call.1} parent=1 // pred_check
      _
    $region27: #{tpu_custom_call.1} parent=1 // pred_check_branch
      %77 = sbr.rel (0) target = $region29
    $region28: #{tpu_custom_call.1} parent=1 // pred_region
      %s79 = ssub.s32 256, 256
      %80 = vsyncadd [#allocation4], %s79
      %s81 = sshll.u32 [#allocation8], 4
      %s82 = int_to_ptr.vmem [resolvable:$true] %s81
      %87 = dma.vmem_to_hbm [thread:$0]  %s82, 256, %s3, [#allocation4], 128, 128, 8
    $region29: #{tpu_custom_call.1} parent=1 // pred_fallthru
      _
    // Predicated region
    $region30: #{tpu_custom_call.1} parent=1 // pred_check
      _
    $region31: #{tpu_custom_call.1} parent=1 // pred_check_branch
      %89 = sbr.rel (0) target = $region33
    $region32: #{tpu_custom_call.1} parent=1 // pred_region
      %90 = dma.done [#allocation4], 256
    $region33: #{tpu_custom_call.1} parent=1 // pred_fallthru
      _
    %91 = vsyncpa [#allocation3], 1
    %92 = vsyncpa [#allocation6], 1
    %93 = vsyncpa [#allocation4], 1

</llo_original>
